<compile_context>
chip_gen: v7x
topology: tpu7x:2x2x1
jax: 0.10.0
libtpu: 0.0.40
codegen_flags: <defaults>
</compile_context>

<pallas_src>
import math

import jax
import jax.numpy as jnp
from jax.experimental import pallas as pl
from jax.experimental.pallas import tpu as pltpu


def _make_kernel(embed_size: int, heads: int, matmul_dtype, approx_reciprocal: bool):
    head_dim = embed_size // heads
    assert head_dim * heads == embed_size
    # torch: softmax(masked_fill(energy, -1e20) / sqrt(embed_size))
    scale = 1.0 / math.sqrt(embed_size)
    masked_bias = -1e20 * scale          # fill value AFTER folding scale into Q
    mm_dtype = jnp.dtype(matmul_dtype)

    def kernel(q_ref, k_ref, v_ref, mask_ref, w_ref, b_ref, o_ref, acc_ref):
        h = pl.program_id(2)                      # head axis (innermost, arbitrary)

        @pl.when(h == 0)
        def _init():
            acc_ref[...] = jnp.zeros_like(acc_ref)

        b_blk, _, q_blk, D = q_ref.shape
        Lk = k_ref.shape[2]
        E = w_ref.shape[2]

        # (b, 1, L, D) -> (b, L, D): drops a middle singleton, layout-free.
        q = q_ref[...].reshape(b_blk, q_blk, D) * scale    # scale folded into Q
        k = k_ref[...].reshape(b_blk, Lk, D)
        v = v_ref[...].reshape(b_blk, Lk, D)

        # energy = Q K^T for this head, batched over the batch block (MXU).
        energy = jnp.einsum("bqd,bkd->bqk", q, k,
                            preferred_element_type=jnp.float32)

        # masked_fill(mask == 0, -1e20)  (value already divided by sqrt(E)).
        keep = mask_ref[...].astype(jnp.float32)           # int8 0/1 -> f32
        energy = jnp.where(keep == 0.0, jnp.float32(masked_bias), energy)

        # numerically stable softmax over keys
        m = jnp.max(energy, axis=-1, keepdims=True)
        p = jnp.exp(energy - m)
        denom = jnp.sum(p, axis=-1, keepdims=True)
        att = p * pl.reciprocal(denom, approx=approx_reciprocal)

        ctx = jnp.einsum("bqk,bkd->bqd", att.astype(v.dtype), v,
                         preferred_element_type=jnp.float32)

        # fc_out contribution of this head: (b*q, D) @ (D, E), f32 accumulation.
        ctx2 = ctx.reshape(b_blk * q_blk, D).astype(mm_dtype)
        acc_ref[...] += jnp.dot(ctx2, w_ref[0],
                                preferred_element_type=jnp.float32)

        @pl.when(h == pl.num_programs(2) - 1)
        def _finalize():
            out = acc_ref[...] + b_ref[...]
            o_ref[...] = out.reshape(b_blk, q_blk, E).astype(o_ref.dtype)

    return kernel


def _vmem_bytes_estimate(b_blk, q_blk, Lk, D, E, mm_itemsize):
    """Rough per-grid-step VMEM footprint (double-buffered blocks + temps)."""
    db = 2  # BlockSpec double-buffering
    blocks = (b_blk * q_blk * D + 2 * b_blk * Lk * D) * mm_itemsize * db   # Q,K,V
    blocks += (b_blk * q_blk * Lk) * 1 * db                                # int8 mask
    blocks += (D * E) * mm_itemsize * db + E * 4 * db                      # W slab, bias
    blocks += (b_blk * q_blk * E) * 4 * db                                 # output block
    scratch = b_blk * q_blk * E * 4                                        # f32 accumulator
    temps = 4 * (b_blk * q_blk * Lk) * 4 + 2 * (b_blk * q_blk * max(D, E)) * 4
    return blocks + scratch + temps


def self_attention_pallas(values, keys, query, mask, fc_w, fc_b, *,
                          embed_size: int, heads: int,
                          matmul_dtype=jnp.bfloat16,
                          out_dtype=jnp.float32,
                          approx_reciprocal: bool = False):
    """values/keys/query: (N, L, E); mask: (N, 1, Lq, Lk) or None; fc_w: (E, E);
    fc_b: (E,).  bf16 matmul inputs by default (f32 accumulation); pass
    matmul_dtype=jnp.float32 for a full-precision path."""
    N, Lq, E = query.shape
    Lk = keys.shape[1]
    assert values.shape[1] == Lk, "key/value lengths must match"
    assert E == embed_size, "embed_size mismatch"
    H = heads
    D = E // H
    assert D * H == E, "embed_size must be divisible by heads"

    mm = jnp.dtype(matmul_dtype)

    # ---- one-time layout work in the wrapper (kept OUT of the kernel) -------
    def split_heads(x):                       # (N, L, E) -> (N, H, L, D)
        L = x.shape[1]
        return x.reshape(N, L, H, D).transpose(0, 2, 1, 3).astype(mm)

    q_h = split_heads(query)
    k_h = split_heads(keys)
    v_h = split_heads(values)

    if mask is None:
        mask3 = jnp.ones((N, Lq, Lk), jnp.int8)
    else:
        mask3 = (mask.reshape(N, Lq, Lk) != 0).astype(jnp.int8)   # 0 => masked

    # fc_out: out = ctx @ W^T + b, with ctx in (head, dim) order  ==>
    #   per-head weight slab  w3[h] = W[:, h*D:(h+1)*D]^T  of shape (D, E).
    w3 = fc_w.reshape(E, H, D).transpose(1, 2, 0).astype(mm)      # (H, D, E)
    b2 = fc_b.reshape(1, E).astype(jnp.float32)

    # ---- VMEM-budget-aware block sizes (generation aware) -------------------
    try:
        info = pltpu.get_tpu_info()
        vmem_cap = int(getattr(info, "vmem_capacity_bytes", 64 * 1024 * 1024))
    except Exception:
        vmem_cap = 64 * 1024 * 1024            # conservative (v7x per-TC VMEM)
    budget = vmem_cap // 2
    mm_size = mm.itemsize

    # query tile: largest multiple-of-8 divisor (or full Lq) that fits budget
    q_cands = sorted({d for d in range(8, min(Lq, 512) + 1, 8) if Lq % d == 0}
                     | {Lq}, reverse=True)
    q_blk = q_cands[-1]
    for cand in q_cands:
        if _vmem_bytes_estimate(1, cand, Lk, D, E, mm_size) <= budget:
            q_blk = cand
            break
    n_q = Lq // q_blk

    # batch block: largest divisor of N within budget, preferring >= 2 parallel
    # grid steps so both v7x TensorCores get work.
    b_blk = 1
    for cand in range(1, N + 1):
        if N % cand:
            continue
        if _vmem_bytes_estimate(cand, q_blk, Lk, D, E, mm_size) > budget:
            continue
        if (N // cand) * n_q >= 2 or cand == 1:
            b_blk = cand

    grid = (N // b_blk, n_q, H)   # (batch: parallel, q-tiles: parallel, heads: arbitrary)

    kernel = _make_kernel(embed_size, heads, matmul_dtype, approx_reciprocal)

    grid_spec = pltpu.PrefetchScalarGridSpec(
        num_scalar_prefetch=0,
        grid=grid,
        in_specs=[
            pl.BlockSpec((b_blk, 1, q_blk, D), lambda n, q, h: (n, h, q, 0)),  # Q
            pl.BlockSpec((b_blk, 1, Lk, D), lambda n, q, h: (n, h, 0, 0)),     # K
            pl.BlockSpec((b_blk, 1, Lk, D), lambda n, q, h: (n, h, 0, 0)),     # V
            pl.BlockSpec((b_blk, q_blk, Lk), lambda n, q, h: (n, q, 0)),       # int8 mask
            pl.BlockSpec((1, D, E), lambda n, q, h: (h, 0, 0)),                # per-head fc_out W
            pl.BlockSpec((1, E), lambda n, q, h: (0, 0)),                      # fc_out bias
        ],
        out_specs=pl.BlockSpec((b_blk, q_blk, E), lambda n, q, h: (n, q, 0)),
        scratch_shapes=[pltpu.VMEM((b_blk * q_blk, E), jnp.float32)],
    )

    return pl.pallas_call(
        kernel,
        out_shape=jax.ShapeDtypeStruct((N, Lq, E), out_dtype),
        grid_spec=grid_spec,
        compiler_params=pltpu.CompilerParams(
            dimension_semantics=("parallel", "parallel", "arbitrary"),
            vmem_limit_bytes=int(min(vmem_cap * 3 // 4, 128 * 1024 * 1024)),
        ),
    )(q_h, k_h, v_h, mask3, w3, b2)


def self_attention_reference(values, keys, query, mask, fc_w, fc_b, *,
                             embed_size: int, heads: int):
    """Pure-JAX replica of the PyTorch forward (highest precision) for checks."""
    N, Lq, E = query.shape
    Lk, Lv = keys.shape[1], values.shape[1]
    D = embed_size // heads
    v = values.reshape(N, Lv, heads, D)
    k = keys.reshape(N, Lk, heads, D)
    q = query.reshape(N, Lq, heads, D)
    energy = jnp.einsum("nqhd,nkhd->nhqk", q, k, precision="highest")
    energy = jnp.where(mask == 0, jnp.float32(-1e20), energy)
    att = jax.nn.softmax(energy / math.sqrt(embed_size), axis=3)
    out = jnp.einsum("nhql,nlhd->nqhd", att, v, precision="highest")
    out = out.reshape(N, Lq, heads * D)
    return jnp.einsum("nqe,fe->nqf", out, fc_w, precision="highest") + fc_b


if __name__ == "__main__":
    N, L, E, H = 2, 8, 32, 4   # batch, seq, embed_size, heads (head_dim = 8)
    # NOTE: E=32 / head_dim=8 is a toy config; lane utilisation is inherently
    # low here (last dims < 128) and is not representative of real workloads.

    key = jax.random.PRNGKey(0)
    kq, kk, kv, kw, kb = jax.random.split(key, 5)

    query = jax.random.normal(kq, (N, L, E), dtype=jnp.float32)
    keys_ = jax.random.normal(kk, (N, L, E), dtype=jnp.float32)
    values = jax.random.normal(kv, (N, L, E), dtype=jnp.float32)

    # mask broadcast over heads: (N, 1, Lq, Lk); 0 => masked (causal mask here)
    mask = jnp.broadcast_to(
        jnp.tril(jnp.ones((L, L), dtype=jnp.float32))[None, None], (N, 1, L, L)
    )

    # fc_out parameters (Linear weight (E, E), bias (E,))
    bound = 1.0 / math.sqrt(E)
    fc_w = jax.random.uniform(kw, (E, E), jnp.float32, -bound, bound)
    fc_b = jax.random.uniform(kb, (E,), jnp.float32, -bound, bound)

    ref = self_attention_reference(values, keys_, query, mask, fc_w, fc_b,
                                   embed_size=E, heads=H)

    # full-precision matmul path
    out_f32 = self_attention_pallas(values, keys_, query, mask, fc_w, fc_b,
                                    embed_size=E, heads=H,
                                    matmul_dtype=jnp.float32)
    out_f32 = jax.block_until_ready(out_f32)
    assert out_f32.shape == (N, L, E)
    assert jnp.allclose(out_f32, ref, rtol=5e-2, atol=5e-2), \
        "f32 kernel mismatch vs reference"

    # default fast path: bf16 matmul inputs, f32 accumulation
    out_bf16mm = self_attention_pallas(values, keys_, query, mask, fc_w, fc_b,
                                       embed_size=E, heads=H)
    out_bf16mm = jax.block_until_ready(out_bf16mm)
    assert out_bf16mm.shape == (N, L, E)
    assert jnp.allclose(out_bf16mm, ref, rtol=1e-1, atol=1e-1), \
        "bf16-matmul kernel mismatch vs reference"

    print("KERNEL_OK")
</pallas_src>

<mosaic_0001>
module attributes {stable_mosaic.version = 11 : i64} {
  func.func @kernel(%arg0: i32, %arg1: i32, %arg2: i32, %arg3: memref<1x1x8x8xf32, #tpu.memory_space<vmem>>, %arg4: memref<1x1x8x8xf32, #tpu.memory_space<vmem>>, %arg5: memref<1x1x8x8xf32, #tpu.memory_space<vmem>>, %arg6: memref<1x8x8xi8, #tpu.memory_space<vmem>>, %arg7: memref<1x8x32xf32, #tpu.memory_space<vmem>>, %arg8: memref<1x32xf32, #tpu.memory_space<vmem>>, %arg9: memref<1x8x32xf32, #tpu.memory_space<vmem>>, %arg10: memref<8x32xf32, #tpu.memory_space<vmem>>) attributes {dimension_semantics = [#tpu.dimension_semantics<parallel>, #tpu.dimension_semantics<parallel>, #tpu.dimension_semantics<arbitrary>], iteration_bounds = array<i64: 2, 1, 4>, scalar_prefetch = 0 : i64, scratch_operands = 1 : i64, tpu.core_type = #tpu.core_type<tc>, window_params = [{transform_indices = @transform_0, window_bounds = array<i64: 1, 1, 8, 8>}, {transform_indices = @transform_1, window_bounds = array<i64: 1, 1, 8, 8>}, {transform_indices = @transform_2, window_bounds = array<i64: 1, 1, 8, 8>}, {transform_indices = @transform_3, window_bounds = array<i64: 1, 8, 8>}, {transform_indices = @transform_4, window_bounds = array<i64: 1, 8, 32>}, {pipeline_mode = #tpu.pipeline_mode<synchronous>, transform_indices = @transform_5, window_bounds = array<i64: 1, 32>}, {transform_indices = @transform_6, window_bounds = array<i64: 1, 8, 32>}]} {
    %c0_i32 = arith.constant 0 : i32
    %0 = arith.cmpi eq, %arg2, %c0_i32 : i32
    %1 = arith.extui %0 : i1 to i32
    %c0_i32_0 = arith.constant 0 : i32
    %2 = arith.cmpi ne, %1, %c0_i32_0 : i32
    scf.if %2 {
      %cst_30 = arith.constant 0.000000e+00 : f32
      %39 = vector.broadcast %cst_30 : f32 to vector<8x32xf32>
      %c0_31 = arith.constant 0 : index
      %c0_32 = arith.constant 0 : index
      %40 = vector.load %arg10[%c0_31, %c0_32] : memref<8x32xf32, #tpu.memory_space<vmem>>, vector<8x32xf32>
      tpu.vector_store %arg10[%c0_31, %c0_32], %39 {strides = array<i32>} : memref<8x32xf32, #tpu.memory_space<vmem>>, vector<8x32xf32>,
    } else {
    }
    %c0 = arith.constant 0 : index
    %c0_1 = arith.constant 0 : index
    %c0_2 = arith.constant 0 : index
    %c0_3 = arith.constant 0 : index
    %3 = vector.load %arg3[%c0, %c0_1, %c0_2, %c0_3] : memref<1x1x8x8xf32, #tpu.memory_space<vmem>>, vector<1x1x8x8xf32>
    %4 = vector.shape_cast %3 : vector<1x1x8x8xf32> to vector<1x8x8xf32>
    %cst = arith.constant 0.176776692 : f32
    %5 = vector.broadcast %cst : f32 to vector<1x8x8xf32>
    %6 = arith.mulf %4, %5 : vector<1x8x8xf32>
    %c0_4 = arith.constant 0 : index
    %c0_5 = arith.constant 0 : index
    %c0_6 = arith.constant 0 : index
    %c0_7 = arith.constant 0 : index
    %7 = vector.load %arg4[%c0_4, %c0_5, %c0_6, %c0_7] : memref<1x1x8x8xf32, #tpu.memory_space<vmem>>, vector<1x1x8x8xf32>
    %8 = vector.shape_cast %7 : vector<1x1x8x8xf32> to vector<1x8x8xf32>
    %c0_8 = arith.constant 0 : index
    %c0_9 = arith.constant 0 : index
    %c0_10 = arith.constant 0 : index
    %c0_11 = arith.constant 0 : index
    %9 = vector.load %arg5[%c0_8, %c0_9, %c0_10, %c0_11] : memref<1x1x8x8xf32, #tpu.memory_space<vmem>>, vector<1x1x8x8xf32>
    %10 = vector.shape_cast %9 : vector<1x1x8x8xf32> to vector<1x8x8xf32>
    "tpu.trace_start"() <{level = 10 : i32, message = "bqd,bkd->bqk"}> : () -> ()
    %cst_12 = arith.constant dense<0.000000e+00> : vector<1x8x8xf32>
    %11 = tpu.matmul %6, %8, %cst_12 {dimension_numbers = #tpu.dot_dimension_numbers<[2], [2], [1], [1], [0, 0, 0, 1, 1, 1], [0], [0]>} : vector<1x8x8xf32>, vector<1x8x8xf32>, vector<1x8x8xf32> -> vector<1x8x8xf32>
    "tpu.trace_stop"() : () -> ()
    %c0_13 = arith.constant 0 : index
    %c0_14 = arith.constant 0 : index
    %c0_15 = arith.constant 0 : index
    %12 = vector.load %arg6[%c0_13, %c0_14, %c0_15] : memref<1x8x8xi8, #tpu.memory_space<vmem>>, vector<1x8x8xi8>
    %13 = arith.sitofp %12 : vector<1x8x8xi8> to vector<1x8x8xf32>
    %cst_16 = arith.constant 0.000000e+00 : f32
    %14 = vector.broadcast %cst_16 : f32 to vector<1x8x8xf32>
    %15 = arith.cmpf oeq, %13, %14 : vector<1x8x8xf32>
    %cst_17 = arith.constant -1.76776698E+19 : f32
    %16 = vector.broadcast %cst_17 : f32 to vector<1x8x8xf32>
    %17 = arith.select %15, %16, %11 : vector<1x8x8xi1>, vector<1x8x8xf32>
    %cst_18 = arith.constant dense<0xFF800000> : vector<1x8xf32>
    %18 = vector.multi_reduction <maximumf>, %17, %cst_18 [2] : vector<1x8x8xf32> to vector<1x8xf32>
    %19 = vector.shape_cast %18 : vector<1x8xf32> to vector<1x8x1xf32>
    %20 = vector.broadcast %19 : vector<1x8x1xf32> to vector<1x8x8xf32>
    %21 = arith.subf %17, %20 : vector<1x8x8xf32>
    %22 = math.exp %21 : vector<1x8x8xf32>
    %cst_19 = arith.constant dense<0.000000e+00> : vector<1x8xf32>
    %23 = vector.multi_reduction <add>, %22, %cst_19 [2] : vector<1x8x8xf32> to vector<1x8xf32>
    %24 = vector.shape_cast %23 : vector<1x8xf32> to vector<1x8x1xf32>
    %25 = tpu.reciprocal %24 : vector<1x8x1xf32> -> vector<1x8x1xf32>
    %26 = vector.broadcast %25 : vector<1x8x1xf32> to vector<1x8x8xf32>
    %27 = arith.mulf %22, %26 : vector<1x8x8xf32>
    "tpu.trace_start"() <{level = 10 : i32, message = "bqk,bkd->bqd"}> : () -> ()
    %cst_20 = arith.constant dense<0.000000e+00> : vector<1x8x8xf32>
    %28 = tpu.matmul %27, %10, %cst_20 {dimension_numbers = #tpu.dot_dimension_numbers<[2], [1], [1], [2], [0, 0, 0, 1, 1, 2], [0], [0]>} : vector<1x8x8xf32>, vector<1x8x8xf32>, vector<1x8x8xf32> -> vector<1x8x8xf32>
    "tpu.trace_stop"() : () -> ()
    %29 = vector.shape_cast %28 : vector<1x8x8xf32> to vector<8x8xf32>
    %c0_21 = arith.constant 0 : index
    %c0_22 = arith.constant 0 : index
    %30 = vector.load %arg10[%c0_21, %c0_22] : memref<8x32xf32, #tpu.memory_space<vmem>>, vector<8x32xf32>
    %c0_23 = arith.constant 0 : index
    %c0_24 = arith.constant 0 : index
    %c0_25 = arith.constant 0 : index
    %31 = vector.load %arg7[%c0_23, %c0_24, %c0_25] : memref<1x8x32xf32, #tpu.memory_space<vmem>>, vector<1x8x32xf32>
    %32 = vector.shape_cast %31 : vector<1x8x32xf32> to vector<8x32xf32>
    %cst_26 = arith.constant dense<0.000000e+00> : vector<8x32xf32>
    %33 = tpu.matmul %29, %32, %cst_26 {dimension_numbers = #tpu.dot_dimension_numbers<[1], [0], [0], [1], [0, 0, 1, 1], [], []>} : vector<8x8xf32>, vector<8x32xf32>, vector<8x32xf32> -> vector<8x32xf32>
    %34 = arith.addf %30, %33 : vector<8x32xf32>
    %c0_27 = arith.constant 0 : index
    %c0_28 = arith.constant 0 : index
    %35 = vector.load %arg10[%c0_27, %c0_28] : memref<8x32xf32, #tpu.memory_space<vmem>>, vector<8x32xf32>
    tpu.vector_store %arg10[%c0_27, %c0_28], %34 {strides = array<i32>} : memref<8x32xf32, #tpu.memory_space<vmem>>, vector<8x32xf32>,
    %c3_i32 = arith.constant 3 : i32
    %36 = arith.cmpi eq, %arg2, %c3_i32 : i32
    %37 = arith.extui %36 : i1 to i32
    %c0_i32_29 = arith.constant 0 : i32
    %38 = arith.cmpi ne, %37, %c0_i32_29 : i32
    scf.if %38 {
      %c0_30 = arith.constant 0 : index
      %c0_31 = arith.constant 0 : index
      %39 = vector.load %arg10[%c0_30, %c0_31] : memref<8x32xf32, #tpu.memory_space<vmem>>, vector<8x32xf32>
      %c0_32 = arith.constant 0 : index
      %c0_33 = arith.constant 0 : index
      %40 = vector.load %arg8[%c0_32, %c0_33] : memref<1x32xf32, #tpu.memory_space<vmem>>, vector<1x32xf32>
      %41 = vector.broadcast %40 : vector<1x32xf32> to vector<8x32xf32>
      %42 = arith.addf %39, %41 : vector<8x32xf32>
      %43 = vector.shape_cast %42 : vector<8x32xf32> to vector<1x8x32xf32>
      %c0_34 = arith.constant 0 : index
      %c0_35 = arith.constant 0 : index
      %c0_36 = arith.constant 0 : index
      %44 = vector.load %arg9[%c0_34, %c0_35, %c0_36] : memref<1x8x32xf32, #tpu.memory_space<vmem>>, vector<1x8x32xf32>
      tpu.vector_store %arg9[%c0_34, %c0_35, %c0_36], %43 {strides = array<i32>} : memref<1x8x32xf32, #tpu.memory_space<vmem>>, vector<1x8x32xf32>,
    } else {
    }
    return
  }
  func.func @transform_0(%arg0: i32, %arg1: i32, %arg2: i32) -> (i32, i32, i32, i32) {
    %c0_i32 = arith.constant 0 : i32
    %c0_i32_0 = arith.constant 0 : i32
    return %arg0, %arg2, %arg1, %c0_i32 : i32, i32, i32, i32
  }
  func.func @transform_1(%arg0: i32, %arg1: i32, %arg2: i32) -> (i32, i32, i32, i32) {
    %c0_i32 = arith.constant 0 : i32
    %c0_i32_0 = arith.constant 0 : i32
    %c0_i32_1 = arith.constant 0 : i32
    return %arg0, %arg2, %c0_i32, %c0_i32_0 : i32, i32, i32, i32
  }
  func.func @transform_2(%arg0: i32, %arg1: i32, %arg2: i32) -> (i32, i32, i32, i32) {
    %c0_i32 = arith.constant 0 : i32
    %c0_i32_0 = arith.constant 0 : i32
    %c0_i32_1 = arith.constant 0 : i32
    return %arg0, %arg2, %c0_i32, %c0_i32_0 : i32, i32, i32, i32
  }
  func.func @transform_3(%arg0: i32, %arg1: i32, %arg2: i32) -> (i32, i32, i32) {
    %c0_i32 = arith.constant 0 : i32
    %c0_i32_0 = arith.constant 0 : i32
    return %arg0, %arg1, %c0_i32 : i32, i32, i32
  }
  func.func @transform_4(%arg0: i32, %arg1: i32, %arg2: i32) -> (i32, i32, i32) {
    %c0_i32 = arith.constant 0 : i32
    %c0_i32_0 = arith.constant 0 : i32
    %c0_i32_1 = arith.constant 0 : i32
    return %arg2, %c0_i32, %c0_i32_0 : i32, i32, i32
  }
  func.func @transform_5(%arg0: i32, %arg1: i32, %arg2: i32) -> (i32, i32) {
    %c0_i32 = arith.constant 0 : i32
    %c0_i32_0 = arith.constant 0 : i32
    %c0_i32_1 = arith.constant 0 : i32
    return %c0_i32, %c0_i32_0 : i32, i32
  }
  func.func @transform_6(%arg0: i32, %arg1: i32, %arg2: i32) -> (i32, i32, i32) {
    %c0_i32 = arith.constant 0 : i32
    %c0_i32_0 = arith.constant 0 : i32
    return %arg0, %arg1, %c0_i32 : i32, i32, i32
  }
}

</mosaic_0001>

<llo_original>
// kernel: tpu_custom_call.1
$region0: #{tpu_custom_call.1}
  #allocation0 [shape = 'u32[]', space=smem, size = 0x4, offset = 0x4, fixed_abs, tag = 'smem constant byte address 0x4 - core index']
  #allocation1 [shape = 'u32[144,128]{1,0:T(1,128)}', space=vmem, size = 0x12000, scoped, tag = 'internal scratch']
  #allocation2 [shape = 'f32[8,32]{1,0:T(8,128)}', space=vmem, size = 0x1000, scoped, tag = 'scratch operand']
  %s0 = inlined_call_operand.hbm [shape: f32[2,4,8,8], index: 0, kind: input, shape index: {}]
  %s1 = inlined_call_operand.hbm [shape: f32[2,4,8,8], index: 1, kind: input, shape index: {}]
  %s2 = inlined_call_operand.hbm [shape: f32[2,4,8,8], index: 2, kind: input, shape index: {}]
  %s3 = inlined_call_operand.vmem [shape: s8[2,8,8], index: 3, kind: input, shape index: {}]
  %s4 = inlined_call_operand.hbm [shape: f32[4,8,32], index: 4, kind: input, shape index: {}]
  %s5 = inlined_call_operand.vmem [shape: f32[1,32], index: 5, kind: input, shape index: {}]
  %s6 = inlined_call_operand.hbm [shape: f32[2,8,32], index: 6, kind: output, shape index: {}]
  %s7 = sld [smem:[#allocation0]]
  $region81: #{tpu_custom_call.1} parent=0
    _
  %s9 = ssub.s32 1, %s7
  %s10 = scalar_select 0, %s9, %s7
  $region1: #{tpu_custom_call.1} parent=0
    #allocation3 [shape = 'u8[8192]{0}', space=vmem, size = 0x2000, scoped, tag = 'input window, operand 0']
    #allocation4 [shape = 's32[2]{0}', space=sflag, size = 0x8, scoped, tag = 'scoped memory for tpu_custom_call.1']
    #allocation5 [shape = 's32[2]{0}', space=sflag, size = 0x8, scoped, tag = 'scoped memory for tpu_custom_call.1']
    #allocation6 [shape = 'u8[8192]{0}', space=vmem, size = 0x2000, scoped, tag = 'input window, operand 1']
    #allocation7 [shape = 's32[2]{0}', space=sflag, size = 0x8, scoped, tag = 'scoped memory for tpu_custom_call.1']
    #allocation8 [shape = 'u8[8192]{0}', space=vmem, size = 0x2000, scoped, tag = 'input window, operand 2']
    #allocation9 [shape = 'u8[8192]{0}', space=vmem, size = 0x2000, scoped, tag = 'input window, operand 4']
    #allocation10 [shape = 's32[2]{0}', space=sflag, size = 0x8, scoped, tag = 'scoped memory for tpu_custom_call.1']
    #allocation11 [shape = 'u8[8192]{0}', space=vmem, size = 0x2000, scoped, tag = 'output window, operand 0']
    %11 = vsyncpa [#allocation4], 0
    %s12 = scalar_lea.sflag [#allocation4], 1
    %13 = vsyncpa %s12, 0
    %14 = vsyncpa [#allocation7], 0
    %s15 = scalar_lea.sflag [#allocation7], 1
    %16 = vsyncpa %s15, 0
    %17 = vsyncpa [#allocation10], 0
    %s18 = scalar_lea.sflag [#allocation10], 1
    %19 = vsyncpa %s18, 0
    %20 = vsyncpa [#allocation5], 0
    %s21 = scalar_lea.sflag [#allocation5], 1
    %22 = vsyncpa %s21, 0
    loop: start=0, step=1, limit=10
    $region2: #{tpu_custom_call.1} parent=1 // loop_pre_header
      _
    $region3: #{tpu_custom_call.1} parent=1 // loop_header
      %s24 = sphi 0, %s28
      %p25 = scmp.ge.s32.totalorder %s24, 10
      %s31 = sphi 0, %s50
      %s32 = sphi 0, %s46
      %s33 = sphi 0, %s42
      %s34 = sphi 0, %s31
      %s35 = sphi 0, %s32
      %s36 = sphi 0, %s33
      %s37 = sphi 0, %s34
      %s38 = sphi 0, %s35
      %s39 = sphi 0, %s36
      %s57 = sphi 0, %s59
      %s60 = sphi 0, %s57
      %s61 = sphi 0, %s60
      %s77 = sphi 0, %s61
      %s85 = sphi 0, %s87
      %s88 = sphi 0, %s85
      %s89 = sphi 0, %s88
      %s105 = sphi 0, %s89
      %s113 = sphi 0, %s115
      %s116 = sphi 0, %s113
      %s117 = sphi 0, %s116
      %s133 = sphi 0, %s117
      %s141 = sphi 0, %s143
      %s144 = sphi 0, %s141
      %s145 = sphi 0, %s144
      %s161 = sphi 0, %s145
      %s167 = sphi 0, %s169
      %s170 = sphi 0, %s167
      %s171 = sphi 0, %s170
      %s187 = sphi 0, %s171
      %s191 = sphi 0, %s191
      %s193 = sphi 0, %s191
      %s194 = sphi 0, %s193
      %s208 = sphi 0, %s194
      %s216 = sphi 0, %s218
      %s219 = sphi 0, %s216
      %s220 = sphi 0, %s219
      %s236 = sphi 0, %s220
    $region4: #{tpu_custom_call.1} parent=1 // loop_header_branch
      %27 = sbr.rel (%p25) target = $region8
    $region5: #{tpu_custom_call.1} parent=1 // loop_body
      %s29 = ssub.s32 %s24, 1
      %s30 = ssub.s32 %s24, 2
      %s40 = sadd.s32 1, %s33
      %p41 = scmp.ge.s32.totalorder %s40, 4
      %s42 = scalar_select %p41, 0, %s40
      %s43 = sadd.s32 1, %s32
      %s44 = scalar_select %p41, %s43, %s32
      %p45 = scmp.ge.s32.totalorder %s44, 1
      %s46 = scalar_select %p45, 0, %s44
      %s47 = sadd.s32 1, %s31
      %s48 = scalar_select %p45, %s47, %s31
      %p49 = scmp.ge.s32.totalorder %s48, 2
      %s50 = scalar_select %p49, 0, %s48
      %s51 = ssub.s32 %s31, %s50
      %s52 = ssub.s32 %s33, %s42
      %s53 = sor.u32 %s51, %s52
      %s54 = ssub.s32 %s32, %s46
      %s55 = sor.u32 %s53, %s54
      %p56 = scmp.eq.s32.totalorder %s55, 0
      %s58 = sadd.s32 %s57, 1
      %s59 = scalar_select %p56, %s57, %s58
      %p62 = pneg %p56
      %p63 = scmp.eq.s32.totalorder %s24, 7
      %p64 = por %p62, %p63
      %p65 = scmp.ne.s32.totalorder %s57, %s60
      %p66 = scmp.eq.s32.totalorder %s24, 0
      %p67 = por %p65, %p66
      %p68 = scmp.ne.s32.totalorder %s57, %s60
      %p69 = scmp.eq.s32.totalorder %s29, 7
      %p70 = por %p68, %p69
      %p71 = scmp.ne.s32.totalorder %s60, %s61
      %p72 = scmp.eq.s32.totalorder %s29, 0
      %p73 = por %p71, %p72
      %p74 = scmp.ne.s32.totalorder %s60, %s61
      %p75 = scmp.eq.s32.totalorder %s30, 7
      %p76 = por %p74, %p75
      %p78 = scmp.ne.s32.totalorder %s61, %s77
      %p79 = scmp.eq.s32.totalorder %s30, 0
      %p80 = por %p78, %p79
      %s81 = ssub.s32 %s31, %s50
      %s82 = ssub.s32 %s33, %s42
      %s83 = sor.u32 %s81, %s82
      %p84 = scmp.eq.s32.totalorder %s83, 0
      %s86 = sadd.s32 %s85, 1
      %s87 = scalar_select %p84, %s85, %s86
      %p90 = pneg %p84
      %p91 = scmp.eq.s32.totalorder %s24, 7
      %p92 = por %p90, %p91
      %p93 = scmp.ne.s32.totalorder %s85, %s88
      %p94 = scmp.eq.s32.totalorder %s24, 0
      %p95 = por %p93, %p94
      %p96 = scmp.ne.s32.totalorder %s85, %s88
      %p97 = scmp.eq.s32.totalorder %s29, 7
      %p98 = por %p96, %p97
      %p99 = scmp.ne.s32.totalorder %s88, %s89
      %p100 = scmp.eq.s32.totalorder %s29, 0
      %p101 = por %p99, %p100
      %p102 = scmp.ne.s32.totalorder %s88, %s89
      %p103 = scmp.eq.s32.totalorder %s30, 7
      %p104 = por %p102, %p103
      %p106 = scmp.ne.s32.totalorder %s89, %s105
      %p107 = scmp.eq.s32.totalorder %s30, 0
      %p108 = por %p106, %p107
      %s109 = ssub.s32 %s31, %s50
      %s110 = ssub.s32 %s33, %s42
      %s111 = sor.u32 %s109, %s110
      %p112 = scmp.eq.s32.totalorder %s111, 0
      %s114 = sadd.s32 %s113, 1
      %s115 = scalar_select %p112, %s113, %s114
      %p118 = pneg %p112
      %p119 = scmp.eq.s32.totalorder %s24, 7
      %p120 = por %p118, %p119
      %p121 = scmp.ne.s32.totalorder %s113, %s116
      %p122 = scmp.eq.s32.totalorder %s24, 0
      %p123 = por %p121, %p122
      %p124 = scmp.ne.s32.totalorder %s113, %s116
      %p125 = scmp.eq.s32.totalorder %s29, 7
      %p126 = por %p124, %p125
      %p127 = scmp.ne.s32.totalorder %s116, %s117
      %p128 = scmp.eq.s32.totalorder %s29, 0
      %p129 = por %p127, %p128
      %p130 = scmp.ne.s32.totalorder %s116, %s117
      %p131 = scmp.eq.s32.totalorder %s30, 7
      %p132 = por %p130, %p131
      %p134 = scmp.ne.s32.totalorder %s117, %s133
      %p135 = scmp.eq.s32.totalorder %s30, 0
      %p136 = por %p134, %p135
      %s137 = ssub.s32 %s31, %s50
      %s138 = ssub.s32 %s32, %s46
      %s139 = sor.u32 %s137, %s138
      %p140 = scmp.eq.s32.totalorder %s139, 0
      %s142 = sadd.s32 %s141, 1
      %s143 = scalar_select %p140, %s141, %s142
      %p146 = pneg %p140
      %p147 = scmp.eq.s32.totalorder %s24, 7
      %p148 = por %p146, %p147
      %p149 = scmp.ne.s32.totalorder %s141, %s144
      %p150 = scmp.eq.s32.totalorder %s24, 0
      %p151 = por %p149, %p150
      %p152 = scmp.ne.s32.totalorder %s141, %s144
      %p153 = scmp.eq.s32.totalorder %s29, 7
      %p154 = por %p152, %p153
      %p155 = scmp.ne.s32.totalorder %s144, %s145
      %p156 = scmp.eq.s32.totalorder %s29, 0
      %p157 = por %p155, %p156
      %p158 = scmp.ne.s32.totalorder %s144, %s145
      %p159 = scmp.eq.s32.totalorder %s30, 7
      %p160 = por %p158, %p159
      %p162 = scmp.ne.s32.totalorder %s145, %s161
      %p163 = scmp.eq.s32.totalorder %s30, 0
      %p164 = por %p162, %p163
      %s165 = ssub.s32 %s33, %s42
      %p166 = scmp.eq.s32.totalorder %s165, 0
      %s168 = sadd.s32 %s167, 1
      %s169 = scalar_select %p166, %s167, %s168
      %p172 = pneg %p166
      %p173 = scmp.eq.s32.totalorder %s24, 7
      %p174 = por %p172, %p173
      %p175 = scmp.ne.s32.totalorder %s167, %s170
      %p176 = scmp.eq.s32.totalorder %s24, 0
      %p177 = por %p175, %p176
      %p178 = scmp.ne.s32.totalorder %s167, %s170
      %p179 = scmp.eq.s32.totalorder %s29, 7
      %p180 = por %p178, %p179
      %p181 = scmp.ne.s32.totalorder %s170, %s171
      %p182 = scmp.eq.s32.totalorder %s29, 0
      %p183 = por %p181, %p182
      %p184 = scmp.ne.s32.totalorder %s170, %s171
      %p185 = scmp.eq.s32.totalorder %s30, 7
      %p186 = por %p184, %p185
      %p188 = scmp.ne.s32.totalorder %s171, %s187
      %p189 = scmp.eq.s32.totalorder %s30, 0
      %p190 = por %p188, %p189
      %s192 = sadd.s32 %s191, 1
      %p195 = scmp.eq.s32.totalorder %s24, 7
      %p196 = scmp.ne.s32.totalorder %s191, %s193
      %p197 = scmp.eq.s32.totalorder %s24, 0
      %p198 = por %p196, %p197
      %p199 = scmp.ne.s32.totalorder %s191, %s193
      %p200 = scmp.eq.s32.totalorder %s29, 7
      %p201 = por %p199, %p200
      %p202 = scmp.ne.s32.totalorder %s193, %s194
      %p203 = scmp.eq.s32.totalorder %s29, 0
      %p204 = por %p202, %p203
      %p205 = scmp.ne.s32.totalorder %s193, %s194
      %p206 = scmp.eq.s32.totalorder %s30, 7
      %p207 = por %p205, %p206
      %p209 = scmp.ne.s32.totalorder %s194, %s208
      %p210 = scmp.eq.s32.totalorder %s30, 0
      %p211 = por %p209, %p210
      %s212 = ssub.s32 %s31, %s50
      %s213 = ssub.s32 %s32, %s46
      %s214 = sor.u32 %s212, %s213
      %p215 = scmp.eq.s32.totalorder %s214, 0
      %s217 = sadd.s32 %s216, 1
      %s218 = scalar_select %p215, %s216, %s217
      %p221 = pneg %p215
      %p222 = scmp.eq.s32.totalorder %s24, 7
      %p223 = por %p221, %p222
      %p224 = scmp.ne.s32.totalorder %s216, %s219
      %p225 = scmp.eq.s32.totalorder %s24, 0
      %p226 = por %p224, %p225
      %p227 = scmp.ne.s32.totalorder %s216, %s219
      %p228 = scmp.eq.s32.totalorder %s29, 7
      %p229 = por %p227, %p228
      %p230 = scmp.ne.s32.totalorder %s219, %s220
      %p231 = scmp.eq.s32.totalorder %s29, 0
      %p232 = por %p230, %p231
      %p233 = scmp.ne.s32.totalorder %s219, %s220
      %p234 = scmp.eq.s32.totalorder %s30, 7
      %p235 = por %p233, %p234
      %p237 = scmp.ne.s32.totalorder %s220, %s236
      %p238 = scmp.eq.s32.totalorder %s30, 0
      %p239 = por %p237, %p238
      %p240 = scmp.le.s32.totalorder 1, %s24
      %p241 = scmp.lt.s32.totalorder %s24, 9
      %p242 = pnand %p240, %p241
      %p243 = pneg %p242
      // Predicated region
      $region9: #{tpu_custom_call.1} parent=5 // pred_check
        _
      $region10: #{tpu_custom_call.1} parent=5 // pred_check_branch
        %245 = sbr.rel (%p242) target = $region12
      $region11: #{tpu_custom_call.1} parent=5 // pred_region
        %s246 = ssub.s32 %s24, 1
        // Predicated region
        $region13: #{tpu_custom_call.1} parent=11 // pred_check
          %p247 = pneg %p204
        $region14: #{tpu_custom_call.1} parent=11 // pred_check_branch
          %249 = sbr.rel (%p247) target = $region16
        $region15: #{tpu_custom_call.1} parent=11 // pred_region
          _
        $region16: #{tpu_custom_call.1} parent=11 // pred_fallthru
          _
      $region12: #{tpu_custom_call.1} parent=5 // pred_fallthru
        _
      %p250 = scmp.lt.s32.totalorder %s24, 8
      // Predicated region
      $region17: #{tpu_custom_call.1} parent=5 // pred_check
        %p251 = pneg %p250
      $region18: #{tpu_custom_call.1} parent=5 // pred_check_branch
        %253 = sbr.rel (%p251) target = $region20
      $region19: #{tpu_custom_call.1} parent=5 // pred_region
        // Predicated region
        $region21: #{tpu_custom_call.1} parent=19 // pred_check
          %p254 = pneg %p67
        $region22: #{tpu_custom_call.1} parent=19 // pred_check_branch
          %256 = sbr.rel (%p254) target = $region24
        $region23: #{tpu_custom_call.1} parent=19 // pred_region
          %s257 = sand.u32 %s57, 1
          %s258 = scalar_lea.sflag [#allocation4], %s257
          %s259 = sand.u32 %s57, 1
          %s260 = smul.addr %s259, 8
          %s261 = scalar_lea.vmem [#allocation3], %s260
          %s263 = ssub.s32 128, 128
          %264 = vsyncadd %s258, %s263
          %s265 = sadd.s32 %s32, %s33
          %s266 = smul.addr %s31, 4
          %s267 = sadd.s32 %s265, %s266
          %s268 = smul.addr %s267, 128
          %s269 = scalar_lea.hbm %s0, %s268
          %s271 = sshll.u32 %s261, 4
          %s272 = int_to_ptr.vmem [resolvable:$true] %s271
          %274 = dma.hbm_to_vmem [thread:$0]  %s269, 128, %s272, %s258
        $region24: #{tpu_custom_call.1} parent=19 // pred_fallthru
          _
        // Predicated region
        $region25: #{tpu_custom_call.1} parent=19 // pred_check
          %p275 = pneg %p95
        $region26: #{tpu_custom_call.1} parent=19 // pred_check_branch
          %277 = sbr.rel (%p275) target = $region28
        $region27: #{tpu_custom_call.1} parent=19 // pred_region
          %s278 = sand.u32 %s24, 1
          %s279 = scalar_lea.sflag [#allocation7], %s278
          %s280 = sand.u32 %s85, 1
          %s281 = smul.addr %s280, 8
          %s282 = scalar_lea.vmem [#allocation6], %s281
          %s284 = ssub.s32 128, 128
          %285 = vsyncadd %s279, %s284
          %s286 = smul.addr %s31, 4
          %s287 = sadd.s32 %s33, %s286
          %s288 = smul.addr %s287, 128
          %s289 = scalar_lea.hbm %s1, %s288
          %s291 = sshll.u32 %s282, 4
          %s292 = int_to_ptr.vmem [resolvable:$true] %s291
          %294 = dma.hbm_to_vmem [thread:$0]  %s289, 128, %s292, %s279
        $region28: #{tpu_custom_call.1} parent=19 // pred_fallthru
          _
        // Predicated region
        $region29: #{tpu_custom_call.1} parent=19 // pred_check
          %p295 = pneg %p123
        $region30: #{tpu_custom_call.1} parent=19 // pred_check_branch
          %297 = sbr.rel (%p295) target = $region32
        $region31: #{tpu_custom_call.1} parent=19 // pred_region
          %s298 = sand.u32 %s24, 1
          %s299 = scalar_lea.sflag [#allocation7], %s298
          %s300 = sand.u32 %s113, 1
          %s301 = smul.addr %s300, 8
          %s302 = scalar_lea.vmem [#allocation8], %s301
          %s304 = ssub.s32 128, 128
          %305 = vsyncadd %s299, %s304
          %s306 = smul.addr %s31, 4
          %s307 = sadd.s32 %s33, %s306
          %s308 = smul.addr %s307, 128
          %s309 = scalar_lea.hbm %s2, %s308
          %s311 = sshll.u32 %s302, 4
          %s312 = int_to_ptr.vmem [resolvable:$true] %s311
          %314 = dma.hbm_to_vmem [thread:$0]  %s309, 128, %s312, %s299
        $region32: #{tpu_custom_call.1} parent=19 // pred_fallthru
          _
        // Predicated region
        $region33: #{tpu_custom_call.1} parent=19 // pred_check
          %p315 = pneg %p151
        $region34: #{tpu_custom_call.1} parent=19 // pred_check_branch
          %317 = sbr.rel (%p315) target = $region36
        $region35: #{tpu_custom_call.1} parent=19 // pred_region
          %p318 = scmp.lt.s32.totalorder %s31, 1
          %s319 = scalar_select %p318, %s31, 1
          %p320 = scmp.lt.s32.totalorder %s32, 0
          %s321 = scalar_select %p320, %s32, 0
          %s322 = sadd.s32 %s321, %s319
          %s323 = smul.addr %s322, 2
          %s324 = scalar_lea.vmem %s3, %s323
        $region36: #{tpu_custom_call.1} parent=19 // pred_fallthru
          _
        // Predicated region
        $region37: #{tpu_custom_call.1} parent=19 // pred_check
          %p325 = pneg %p177
        $region38: #{tpu_custom_call.1} parent=19 // pred_check_branch
          %327 = sbr.rel (%p325) target = $region40
        $region39: #{tpu_custom_call.1} parent=19 // pred_region
          %s328 = sand.u32 %s167, 1
          %s329 = scalar_lea.sflag [#allocation10], %s328
          %s330 = sand.u32 %s167, 1
          %s331 = smul.addr %s330, 8
          %s332 = scalar_lea.vmem [#allocation9], %s331
          %s334 = ssub.s32 128, 128
          %335 = vsyncadd %s329, %s334
          %s336 = smul.addr %s33, 128
          %s337 = scalar_lea.hbm %s4, %s336
          %s339 = sshll.u32 %s332, 4
          %s340 = int_to_ptr.vmem [resolvable:$true] %s339
          %342 = dma.hbm_to_vmem [thread:$0]  %s337, 128, %s340, %s329
        $region40: #{tpu_custom_call.1} parent=19 // pred_fallthru
          _
      $region20: #{tpu_custom_call.1} parent=5 // pred_fallthru
        _
      %p343 = scmp.le.s32.totalorder 1, %s24
      %p344 = scmp.lt.s32.totalorder %s24, 9
      %p345 = pnand %p343, %p344
      %p346 = pneg %p345
      // Predicated region
      $region41: #{tpu_custom_call.1} parent=5 // pred_check
        _
      $region42: #{tpu_custom_call.1} parent=5 // pred_check_branch
        %348 = sbr.rel (%p345) target = $region44
      $region43: #{tpu_custom_call.1} parent=5 // pred_region
        %s349 = ssub.s32 %s24, 1
        %s350 = sand.u32 %s60, 1
        %s351 = scalar_lea.sflag [#allocation4], %s350
        %s352 = sand.u32 %s60, 1
        %s353 = smul.addr %s352, 8
        %s354 = scalar_lea.vmem [#allocation3], %s353
        // Predicated region
        $region45: #{tpu_custom_call.1} parent=43 // pred_check
          %p355 = pneg %p73
        $region46: #{tpu_custom_call.1} parent=43 // pred_check_branch
          %357 = sbr.rel (%p355) target = $region48
        $region47: #{tpu_custom_call.1} parent=43 // pred_region
          %358 = dma.done %s351, 128
        $region48: #{tpu_custom_call.1} parent=43 // pred_fallthru
          _
        %s359 = sand.u32 %s29, 1
        %s360 = scalar_lea.sflag [#allocation7], %s359
        %s361 = sand.u32 %s88, 1
        %s362 = smul.addr %s361, 8
        %s363 = scalar_lea.vmem [#allocation6], %s362
        // Predicated region
        $region49: #{tpu_custom_call.1} parent=43 // pred_check
          %p364 = pneg %p101
        $region50: #{tpu_custom_call.1} parent=43 // pred_check_branch
          %366 = sbr.rel (%p364) target = $region52
        $region51: #{tpu_custom_call.1} parent=43 // pred_region
          %367 = dma.done %s360, 128
        $region52: #{tpu_custom_call.1} parent=43 // pred_fallthru
          _
        %s368 = sand.u32 %s29, 1
        %s369 = scalar_lea.sflag [#allocation7], %s368
        %s370 = sand.u32 %s116, 1
        %s371 = smul.addr %s370, 8
        %s372 = scalar_lea.vmem [#allocation8], %s371
        // Predicated region
        $region53: #{tpu_custom_call.1} parent=43 // pred_check
          %p373 = pneg %p129
        $region54: #{tpu_custom_call.1} parent=43 // pred_check_branch
          %375 = sbr.rel (%p373) target = $region56
        $region55: #{tpu_custom_call.1} parent=43 // pred_region
          %376 = dma.done %s369, 128
        $region56: #{tpu_custom_call.1} parent=43 // pred_fallthru
          _
        %s377 = sand.u32 %s170, 1
        %s378 = scalar_lea.sflag [#allocation10], %s377
        %s379 = sand.u32 %s170, 1
        %s380 = smul.addr %s379, 8
        %s381 = scalar_lea.vmem [#allocation9], %s380
        // Predicated region
        $region57: #{tpu_custom_call.1} parent=43 // pred_check
          %p382 = pneg %p183
        $region58: #{tpu_custom_call.1} parent=43 // pred_check_branch
          %384 = sbr.rel (%p382) target = $region60
        $region59: #{tpu_custom_call.1} parent=43 // pred_region
          %385 = dma.done %s378, 128
        $region60: #{tpu_custom_call.1} parent=43 // pred_fallthru
          _
        %s386 = sand.u32 %s60, 1
        %s387 = scalar_lea.sflag [#allocation4], %s386
        %s388 = sand.u32 %s60, 1
        %s389 = smul.addr %s388, 8
        %s390 = scalar_lea.vmem [#allocation3], %s389
        %p391 = pneg %p73
        %p392 = pneg %p70
        %s393 = sand.u32 %s29, 1
        %s394 = scalar_lea.sflag [#allocation7], %s393
        %s395 = sand.u32 %s88, 1
        %s396 = smul.addr %s395, 8
        %s397 = scalar_lea.vmem [#allocation6], %s396
        %p398 = pneg %p101
        %p399 = pneg %p98
        %s400 = sand.u32 %s29, 1
        %s401 = scalar_lea.sflag [#allocation7], %s400
        %s402 = sand.u32 %s116, 1
        %s403 = smul.addr %s402, 8
        %s404 = scalar_lea.vmem [#allocation8], %s403
        %p405 = pneg %p129
        %p406 = pneg %p126
        %p407 = scmp.lt.s32.totalorder %s34, 1
        %s408 = scalar_select %p407, %s34, 1
        %p409 = scmp.lt.s32.totalorder %s35, 0
        %s410 = scalar_select %p409, %s35, 0
        %s411 = sadd.s32 %s410, %s408
        %s412 = smul.addr %s411, 2
        %s413 = scalar_lea.vmem %s3, %s412
        %p414 = pneg %p157
        %p415 = pneg %p154
        %s416 = sand.u32 %s170, 1
        %s417 = scalar_lea.sflag [#allocation10], %s416
        %s418 = sand.u32 %s170, 1
        %s419 = smul.addr %s418, 8
        %s420 = scalar_lea.vmem [#allocation9], %s419
        %p421 = pneg %p183
        %p422 = pneg %p180
        %p423 = pneg %p204
        %p424 = pneg %p201
        %p425 = pneg %p232
        %p426 = pneg %p229
        %s427 = sand.u32 %s219, 1
        %s428 = scalar_lea.sflag [#allocation5], %s427
        %s429 = sand.u32 %s219, 1
        %s430 = smul.addr %s429, 8
        %s431 = scalar_lea.vmem [#allocation11], %s430
        %p432 = scmp.lt.s32.totalorder %s34, 1
        %s433 = scalar_select %p432, %s34, 1
        %p434 = scmp.lt.s32.totalorder %s35, 0
        %s435 = scalar_select %p434, %s35, 0
        %s436 = sadd.s32 %s435, %s433
        %s437 = smul.addr %s436, 2
        %s438 = scalar_lea.vmem %s3, %s437
        %p439 = scmp.eq.s32.totalorder %s36, 0
        // Predicated region
        $region61: #{tpu_custom_call.1} parent=43 // pred_check
          %p440 = pneg %p439
        $region62: #{tpu_custom_call.1} parent=43 // pred_check_branch
          %442 = sbr.rel (%p440) target = $region64
        $region63: #{tpu_custom_call.1} parent=43 // pred_region
          %vm443 = vcmask 261120
          %444 = vst.msk [vmem:[#allocation2] sm:$0xff] %vm443, 0.0
        $region64: #{tpu_custom_call.1} parent=43 // pred_fallthru
          _
        %v445 = vld [vmem:[%s354] sm:$0xff]
        %v446 = vmul.f32 %v445, 0.17677669
        %v447 = vld [vmem:[%s363] sm:$0xff]
        %v448 = vld [vmem:[%s372] sm:$0xff]
        %vm449 = vcmask 64512
        %v451 = vsel %vm449, %v446, 0
        %v454 = vsel %vm449, %v447, 0
        %456 = vmatprep.subr.mxu0 0.0
        %457 = vmatpush1.xpose.msra.mxu0 %v454
        %458 = vmatprep.subr.mxu0 0.0
        %459 = vmatpush1.xpose.msra.mxu0 0.0
        %460 = vmatprep.subr.mxu0 0.0
        %461 = vmatpush1.xpose.msra.mxu0 0.0
        %462 = vmatprep.subr.mxu0 0.0
        %463 = vmatpush1.xpose.msra.mxu0 0.0
        %464 = vmatprep.subr.mxu0 0.0
        %465 = vmatpush1.xpose.msra.mxu0 0.0
        %466 = vmatprep.subr.mxu0 0.0
        %467 = vmatpush1.xpose.msra.mxu0 0.0
        %468 = vmatprep.subr.mxu0 0.0
        %469 = vmatpush1.xpose.msra.mxu0 0.0
        %470 = vmatprep.subr.mxu0 0.0
        %471 = vmatpush1.xpose.msra.mxu0 0.0
        %472 = vmatprep.subr.mxu0 0.0
        %473 = vmatpush1.xpose.msra.mxu0 0.0
        %474 = vmatprep.subr.mxu0 0.0
        %475 = vmatpush1.xpose.msra.mxu0 0.0
        %476 = vmatprep.subr.mxu0 0.0
        %477 = vmatpush1.xpose.msra.mxu0 0.0
        %478 = vmatprep.subr.mxu0 0.0
        %479 = vmatpush1.xpose.msra.mxu0 0.0
        %480 = vmatprep.subr.mxu0 0.0
        %481 = vmatpush1.xpose.msra.mxu0 0.0
        %482 = vmatprep.subr.mxu0 0.0
        %483 = vmatpush1.xpose.msra.mxu0 0.0
        %484 = vmatprep.subr.mxu0 0.0
        %485 = vmatpush1.xpose.msra.mxu0 0.0
        %486 = vmatprep.subr.mxu0 0.0
        %487 = vmatpush1.xpose.msra.mxu0 0.0
        %488 = vmatprep.subr.mxu0 0.0
        %489 = vmatpush1.xpose.msra.mxu0 0.0
        %490 = vmatprep.subr.mxu0 0.0
        %491 = vmatpush1.xpose.msra.mxu0 0.0
        %492 = vmatprep.subr.mxu0 0.0
        %493 = vmatpush1.xpose.msra.mxu0 0.0
        %494 = vmatprep.subr.mxu0 0.0
        %495 = vmatpush1.xpose.msra.mxu0 0.0
        %496 = vmatprep.subr.mxu0 0.0
        %497 = vmatpush1.xpose.msra.mxu0 0.0
        %498 = vmatprep.subr.mxu0 0.0
        %499 = vmatpush1.xpose.msra.mxu0 0.0
        %500 = vmatprep.subr.mxu0 0.0
        %501 = vmatpush1.xpose.msra.mxu0 0.0
        %502 = vmatprep.subr.mxu0 0.0
        %503 = vmatpush1.xpose.msra.mxu0 0.0
        %504 = vmatprep.subr.mxu0 0.0
        %505 = vmatpush1.xpose.msra.mxu0 0.0
        %506 = vmatprep.subr.mxu0 0.0
        %507 = vmatpush1.xpose.msra.mxu0 0.0
        %508 = vmatprep.subr.mxu0 0.0
        %509 = vmatpush1.xpose.msra.mxu0 0.0
        %510 = vmatprep.subr.mxu0 0.0
        %511 = vmatpush1.xpose.msra.mxu0 0.0
        %512 = vmatprep.subr.mxu0 0.0
        %513 = vmatpush1.xpose.msra.mxu0 0.0
        %514 = vmatprep.subr.mxu0 0.0
        %515 = vmatpush1.xpose.msra.mxu0 0.0
        %516 = vmatprep.subr.mxu0 0.0
        %517 = vmatpush1.xpose.msra.mxu0 0.0
        %518 = vmatprep.subr.mxu0 0.0
        %519 = vmatpush1.xpose.msra.mxu0 0.0
        %520 = vmatprep.mubr.f32.mxu0 0.0
        %521 = vmatmul.mubr.f32.gmra.mrb[0].mxu0 %v451
        %v522 = vpop.f32.mrb[0].mxu0
        %v523 = vadd.f32 0.0, %v522
        %v524 = vpop.f32.mrb[0].mxu0
        %525 = vdwg.mxu0
        %v526 = vld [vmem:[%s438] sm:$0x3]
        %v527 = vunpack.c.0.s8 %v526
        %v528 = vcvt.s32.f32 %v527
        %vm529 = vcmp.eq.f32.partialorder %v528, 0.0
        %v530 = vsel %vm529, -1.767767e+19, %v523
        %v531 = vsel %vm449, %v530, -inf
        %532 = vmax.xlane.f32.xlu0 %v531
        %v533 = vpop.xlane.xlu0 %532
        %v534 = vsub.f32 %v530, %v533
        %v535 = vmul.f32 %v534, 1.442695
        %v536 = vpow.pop %v535
        %v537 = vsel %vm449, %v536, 0.0
        %538 = vadd.xlane.f32.xlu0 %v537
        %v539 = vpop.xlane.xlu0 %538
        %v540 = vrcp.pop %v539
        %v541 = vmul.f32 %v536, %v540
        %v543 = vsel %vm449, %v541, 0
        %545 = vmatprep.subr.mxu0 0.0
        %546 = vmatpush1.msra.mxu0 %v448
        %547 = vmatprep.subr.mxu0 0.0
        %548 = vmatpush1.msra.mxu0 0.0
        %549 = vmatprep.subr.mxu0 0.0
        %550 = vmatpush1.msra.mxu0 0.0
        %551 = vmatprep.subr.mxu0 0.0
        %552 = vmatpush1.msra.mxu0 0.0
        %553 = vmatprep.subr.mxu0 0.0
        %554 = vmatpush1.msra.mxu0 0.0
        %555 = vmatprep.subr.mxu0 0.0
        %556 = vmatpush1.msra.mxu0 0.0
        %557 = vmatprep.subr.mxu0 0.0
        %558 = vmatpush1.msra.mxu0 0.0
        %559 = vmatprep.subr.mxu0 0.0
        %560 = vmatpush1.msra.mxu0 0.0
        %561 = vmatprep.subr.mxu0 0.0
        %562 = vmatpush1.msra.mxu0 0.0
        %563 = vmatprep.subr.mxu0 0.0
        %564 = vmatpush1.msra.mxu0 0.0
        %565 = vmatprep.subr.mxu0 0.0
        %566 = vmatpush1.msra.mxu0 0.0
        %567 = vmatprep.subr.mxu0 0.0
        %568 = vmatpush1.msra.mxu0 0.0
        %569 = vmatprep.subr.mxu0 0.0
        %570 = vmatpush1.msra.mxu0 0.0
        %571 = vmatprep.subr.mxu0 0.0
        %572 = vmatpush1.msra.mxu0 0.0
        %573 = vmatprep.subr.mxu0 0.0
        %574 = vmatpush1.msra.mxu0 0.0
        %575 = vmatprep.subr.mxu0 0.0
        %576 = vmatpush1.msra.mxu0 0.0
        %577 = vmatprep.subr.mxu0 0.0
        %578 = vmatpush1.msra.mxu0 0.0
        %579 = vmatprep.subr.mxu0 0.0
        %580 = vmatpush1.msra.mxu0 0.0
        %581 = vmatprep.subr.mxu0 0.0
        %582 = vmatpush1.msra.mxu0 0.0
        %583 = vmatprep.subr.mxu0 0.0
        %584 = vmatpush1.msra.mxu0 0.0
        %585 = vmatprep.subr.mxu0 0.0
        %586 = vmatpush1.msra.mxu0 0.0
        %587 = vmatprep.subr.mxu0 0.0
        %588 = vmatpush1.msra.mxu0 0.0
        %589 = vmatprep.subr.mxu0 0.0
        %590 = vmatpush1.msra.mxu0 0.0
        %591 = vmatprep.subr.mxu0 0.0
        %592 = vmatpush1.msra.mxu0 0.0
        %593 = vmatprep.subr.mxu0 0.0
        %594 = vmatpush1.msra.mxu0 0.0
        %595 = vmatprep.subr.mxu0 0.0
        %596 = vmatpush1.msra.mxu0 0.0
        %597 = vmatprep.subr.mxu0 0.0
        %598 = vmatpush1.msra.mxu0 0.0
        %599 = vmatprep.subr.mxu0 0.0
        %600 = vmatpush1.msra.mxu0 0.0
        %601 = vmatprep.subr.mxu0 0.0
        %602 = vmatpush1.msra.mxu0 0.0
        %603 = vmatprep.subr.mxu0 0.0
        %604 = vmatpush1.msra.mxu0 0.0
        %605 = vmatprep.subr.mxu0 0.0
        %606 = vmatpush1.msra.mxu0 0.0
        %607 = vmatprep.subr.mxu0 0.0
        %608 = vmatpush1.msra.mxu0 0.0
        %609 = vmatprep.mubr.f32.mxu0 0.0
        %610 = vmatmul.mubr.f32.gmra.mrb[0].mxu0 %v543
        %v611 = vpop.f32.mrb[0].mxu0
        %v612 = vadd.f32 0.0, %v611
        %v613 = vpop.f32.mrb[0].mxu0
        %614 = vdwg.mxu0
        %v615 = vld [vmem:[#allocation2] sm:$0xff]
        %v616 = vld [vmem:[%s381] sm:$0xff]
        %v618 = vsel %vm449, %v612, 0
        %620 = vmatprep.subr.mxu0 0.0
        %621 = vmatpush1.msra.mxu0 %v616
        %622 = vmatprep.subr.mxu0 0.0
        %623 = vmatpush1.msra.mxu0 0.0
        %624 = vmatprep.subr.mxu0 0.0
        %625 = vmatpush1.msra.mxu0 0.0
        %626 = vmatprep.subr.mxu0 0.0
        %627 = vmatpush1.msra.mxu0 0.0
        %628 = vmatprep.subr.mxu0 0.0
        %629 = vmatpush1.msra.mxu0 0.0
        %630 = vmatprep.subr.mxu0 0.0
        %631 = vmatpush1.msra.mxu0 0.0
        %632 = vmatprep.subr.mxu0 0.0
        %633 = vmatpush1.msra.mxu0 0.0
        %634 = vmatprep.subr.mxu0 0.0
        %635 = vmatpush1.msra.mxu0 0.0
        %636 = vmatprep.subr.mxu0 0.0
        %637 = vmatpush1.msra.mxu0 0.0
        %638 = vmatprep.subr.mxu0 0.0
        %639 = vmatpush1.msra.mxu0 0.0
        %640 = vmatprep.subr.mxu0 0.0
        %641 = vmatpush1.msra.mxu0 0.0
        %642 = vmatprep.subr.mxu0 0.0
        %643 = vmatpush1.msra.mxu0 0.0
        %644 = vmatprep.subr.mxu0 0.0
        %645 = vmatpush1.msra.mxu0 0.0
        %646 = vmatprep.subr.mxu0 0.0
        %647 = vmatpush1.msra.mxu0 0.0
        %648 = vmatprep.subr.mxu0 0.0
        %649 = vmatpush1.msra.mxu0 0.0
        %650 = vmatprep.subr.mxu0 0.0
        %651 = vmatpush1.msra.mxu0 0.0
        %652 = vmatprep.subr.mxu0 0.0
        %653 = vmatpush1.msra.mxu0 0.0
        %654 = vmatprep.subr.mxu0 0.0
        %655 = vmatpush1.msra.mxu0 0.0
        %656 = vmatprep.subr.mxu0 0.0
        %657 = vmatpush1.msra.mxu0 0.0
        %658 = vmatprep.subr.mxu0 0.0
        %659 = vmatpush1.msra.mxu0 0.0
        %660 = vmatprep.subr.mxu0 0.0
        %661 = vmatpush1.msra.mxu0 0.0
        %662 = vmatprep.subr.mxu0 0.0
        %663 = vmatpush1.msra.mxu0 0.0
        %664 = vmatprep.subr.mxu0 0.0
        %665 = vmatpush1.msra.mxu0 0.0
        %666 = vmatprep.subr.mxu0 0.0
        %667 = vmatpush1.msra.mxu0 0.0
        %668 = vmatprep.subr.mxu0 0.0
        %669 = vmatpush1.msra.mxu0 0.0
        %670 = vmatprep.subr.mxu0 0.0
        %671 = vmatpush1.msra.mxu0 0.0
        %672 = vmatprep.subr.mxu0 0.0
        %673 = vmatpush1.msra.mxu0 0.0
        %674 = vmatprep.subr.mxu0 0.0
        %675 = vmatpush1.msra.mxu0 0.0
        %676 = vmatprep.subr.mxu0 0.0
        %677 = vmatpush1.msra.mxu0 0.0
        %678 = vmatprep.subr.mxu0 0.0
        %679 = vmatpush1.msra.mxu0 0.0
        %680 = vmatprep.subr.mxu0 0.0
        %681 = vmatpush1.msra.mxu0 0.0
        %682 = vmatprep.subr.mxu0 0.0
        %683 = vmatpush1.msra.mxu0 0.0
        %684 = vmatprep.mubr.f32.mxu0 0.0
        %685 = vmatmul.mubr.f32.gmra.mrb[0].mxu0 %v618
        %v686 = vpop.f32.mrb[0].mxu0
        %v687 = vadd.f32 0.0, %v686
        %v688 = vpop.f32.mrb[0].mxu0
        %689 = vdwg.mxu0
        %v690 = vadd.f32 %v615, %v687
        %vm691 = vcmask 261120
        %692 = vst.msk [vmem:[#allocation2] sm:$0xff] %vm691, %v690
        %p693 = scmp.eq.s32.totalorder %s36, 3
        // Predicated region
        $region65: #{tpu_custom_call.1} parent=43 // pred_check
          %p694 = pneg %p693
        $region66: #{tpu_custom_call.1} parent=43 // pred_check_branch
          %696 = sbr.rel (%p694) target = $region68
        $region67: #{tpu_custom_call.1} parent=43 // pred_region
          %v697 = vld [vmem:[#allocation2] sm:$0xff]
          %v698 = vld [vmem:[%s5] sm:$0x1]
          %v700 = vlaneseq
          %v701 = vshrl.u32 %v700, 7
          %v702 = vsub.s32 0, %v701
          %v703 = vrot.slane %v698, %v702
          %v705 = vadd.f32 %v697, %v703
          %706 = vst.msk [vmem:[%s431] sm:$0xff] %vm691, %v705
        $region68: #{tpu_custom_call.1} parent=43 // pred_fallthru
          _
        %s707 = sand.u32 %s219, 1
        %s708 = scalar_lea.sflag [#allocation5], %s707
        %s709 = sand.u32 %s219, 1
        %s710 = smul.addr %s709, 8
        %s711 = scalar_lea.vmem [#allocation11], %s710
        // Predicated region
        $region69: #{tpu_custom_call.1} parent=43 // pred_check
          %p712 = pneg %p229
        $region70: #{tpu_custom_call.1} parent=43 // pred_check_branch
          %714 = sbr.rel (%p712) target = $region72
        $region71: #{tpu_custom_call.1} parent=43 // pred_region
          %s716 = ssub.s32 128, 128
          %717 = vsyncadd %s708, %s716
          %s718 = sadd.s32 %s35, %s34
          %s719 = smul.addr %s718, 128
          %s720 = scalar_lea.hbm %s6, %s719
          %s722 = sshll.u32 %s711, 4
          %s723 = int_to_ptr.vmem [resolvable:$true] %s722
          %725 = dma.vmem_to_hbm [thread:$0]  %s723, 128, %s720, %s708
        $region72: #{tpu_custom_call.1} parent=43 // pred_fallthru
          _
      $region44: #{tpu_custom_call.1} parent=5 // pred_fallthru
        _
      %p726 = scmp.le.s32.totalorder 2, %s24
      // Predicated region
      $region73: #{tpu_custom_call.1} parent=5 // pred_check
        %p727 = pneg %p726
      $region74: #{tpu_custom_call.1} parent=5 // pred_check_branch
        %729 = sbr.rel (%p727) target = $region76
      $region75: #{tpu_custom_call.1} parent=5 // pred_region
        %s730 = ssub.s32 %s24, 2
        // Predicated region
        $region77: #{tpu_custom_call.1} parent=75 // pred_check
          %p731 = pneg %p235
        $region78: #{tpu_custom_call.1} parent=75 // pred_check_branch
          %733 = sbr.rel (%p731) target = $region80
        $region79: #{tpu_custom_call.1} parent=75 // pred_region
          %s734 = sand.u32 %s220, 1
          %s735 = scalar_lea.sflag [#allocation5], %s734
          %s736 = sand.u32 %s220, 1
          %s737 = smul.addr %s736, 8
          %s738 = scalar_lea.vmem [#allocation11], %s737
          %739 = dma.done %s735, 128
        $region80: #{tpu_custom_call.1} parent=75 // pred_fallthru
          _
      $region76: #{tpu_custom_call.1} parent=5 // pred_fallthru
        _
    $region6: #{tpu_custom_call.1} parent=1 // loop_footer
      %s28 = sadd.s32 1, %s24
    $region7: #{tpu_custom_call.1} parent=1 // loop_footer_branch
      %23 = sbr.rel target = $region3
    $region8: #{tpu_custom_call.1} parent=1 // loop_exit
      _
    %740 = vsyncpa [#allocation4], 1
    %s741 = scalar_lea.sflag [#allocation4], 1
    %742 = vsyncpa %s741, 1
    %743 = vsyncpa [#allocation7], 1
    %s744 = scalar_lea.sflag [#allocation7], 1
    %745 = vsyncpa %s744, 1
    %746 = vsyncpa [#allocation10], 1
    %s747 = scalar_lea.sflag [#allocation10], 1
    %748 = vsyncpa %s747, 1
    %749 = vsyncpa [#allocation5], 1
    %s750 = scalar_lea.sflag [#allocation5], 1
    %751 = vsyncpa %s750, 1

</llo_original>
